<compile_context>
chip_gen: v7x
topology: tpu7x:2x2x1
jax: 0.10.0
libtpu: 0.0.40
codegen_flags: <defaults>
</compile_context>

<pallas_src>
import functools

import jax
import jax.numpy as jnp
from jax.experimental import pallas as pl
from jax.experimental.pallas import tpu as pltpu


def _round_up(x, m):
    return (x + m - 1) // m * m


def _ls_ce_kernel(lprobs_ref, target_ref, out_ref, nll_acc, smooth_acc, *,
                  smoothing, ignore_index, vocab_size, n_rows, row_tile,
                  inner_steps):
    o = pl.program_id(0)          # outer split (parallel across cores on v7x)
    i = pl.program_id(1)          # inner reduction step ("arbitrary")

    @pl.when(i == 0)
    def _():
        nll_acc[0] = 0.0
        smooth_acc[0] = 0.0

    lp = lprobs_ref[...].astype(jnp.float32)        # (tn, V), cast in VMEM
    tgt = target_ref[...]                           # (tn, 1) int32

    # Global row index for each sublane of this tile.  Computed from the
    # UNclamped tile index, so a duplicated (clamped) tail tile or the padded
    # part of a partial tile is fully masked out.
    tile = o * inner_steps + i
    row0 = tile * row_tile
    row_ids = row0 + jax.lax.broadcasted_iota(jnp.int32, (row_tile, 1), 0)
    valid = row_ids < n_rows                        # (tn, 1) bool
    if ignore_index is not None:
        valid = jnp.logical_and(valid, tgt != ignore_index)

    # One fused masking pass over the (tn, V) tile, then two reductions.
    lp_m = jnp.where(valid, lp, 0.0)                                  # (tn, V)
    col = jax.lax.broadcasted_iota(jnp.int32, lp_m.shape, 1)
    nll_part = jnp.sum(jnp.where(col == tgt, lp_m, 0.0))              # gather
    smooth_part = jnp.sum(lp_m)

    nll_acc[0] += -nll_part
    smooth_acc[0] += -smooth_part

    @pl.when(i == pl.num_programs(1) - 1)
    def _():
        eps_i = smoothing / vocab_size
        loss = (1.0 - smoothing) * nll_acc[0] + eps_i * smooth_acc[0]
        out_ref[...] = jnp.full((1, 1), loss, dtype=out_ref.dtype)


def label_smoothed_cross_entropy(lprobs, target, *, smoothing,
                                 ignore_index=None, reduce=True,
                                 row_tile=1024, num_splits=None,
                                 vmem_limit_bytes=48 * 1024 * 1024):
    """Forward of LabelSmoothedCrossEntropyCriterion (reduce=True path).

    lprobs: (..., V) log-probabilities, any float dtype (kept native in HBM).
    target: (...,) or (..., 1) integer class indices.
    Returns a scalar float32 loss.
    """
    if not reduce:
        # TODO(synk): reduce=False (per-token loss) path not implemented in-kernel.
        raise NotImplementedError("only reduce=True is implemented")

    V = lprobs.shape[-1]
    if target.ndim == lprobs.ndim:            # already unsqueezed(-1)
        assert target.shape[-1] == 1, "trailing target dim must be 1"
        target = target.reshape(target.shape[:-1])
    assert target.shape == lprobs.shape[:-1], (target.shape, lprobs.shape)

    lp2 = lprobs.reshape(-1, V)               # NATIVE dtype: no HBM upcast copy
    tgt2 = target.reshape(-1, 1).astype(jnp.int32)
    N = lp2.shape[0]

    # Row tile: multiple of 8 sublanes; keep the double-buffered lprobs block
    # under ~8 MiB so it plus the f32 intermediates comfortably fit the raised
    # scoped-VMEM limit on every generation (including v7x's 64 MiB VMEM).
    itemsize = jnp.dtype(lp2.dtype).itemsize
    block_budget = 8 * 1024 * 1024
    max_tn = max(8, (block_budget // (2 * V * itemsize)) // 8 * 8)
    tn = max(8, min(_round_up(row_tile, 8), max_tn, _round_up(N, 8)))

    total_tiles = pl.cdiv(N, tn)
    if num_splits is None:
        # 2-way outer split feeds both TensorCores on v7x; harmless on 1-TC chips.
        num_splits = 2 if total_tiles >= 2 else 1
    num_splits = max(1, min(num_splits, total_tiles))
    inner_steps = pl.cdiv(total_tiles, num_splits)

    def lp_map(o, i):
        # Clamp so we never request a fully out-of-bounds block; the kernel's
        # row mask (built from the unclamped index) zeroes its contribution.
        return (jnp.minimum(o * inner_steps + i, total_tiles - 1), 0)

    kernel = functools.partial(
        _ls_ce_kernel,
        smoothing=float(smoothing),
        ignore_index=ignore_index,
        vocab_size=V,
        n_rows=N,
        row_tile=tn,
        inner_steps=inner_steps,
    )

    partials = pl.pallas_call(
        kernel,
        out_shape=jax.ShapeDtypeStruct((num_splits, 1), jnp.float32),
        grid_spec=pltpu.PrefetchScalarGridSpec(
            num_scalar_prefetch=0,
            grid=(num_splits, inner_steps),
            in_specs=[
                pl.BlockSpec((tn, V), lp_map),
                pl.BlockSpec((tn, 1), lp_map),
            ],
            out_specs=pl.BlockSpec((1, 1), lambda o, i: (o, 0)),
            scratch_shapes=[
                pltpu.SMEM((1,), jnp.float32),    # running sum of nll_loss
                pltpu.SMEM((1,), jnp.float32),    # running sum of smooth_loss
            ],
        ),
        compiler_params=pltpu.CompilerParams(
            dimension_semantics=("parallel", "arbitrary"),
            vmem_limit_bytes=vmem_limit_bytes),
    )(lp2, tgt2)

    # Per-split partials (also shortens each f32 accumulation chain); sum here.
    return jnp.sum(partials)


def _reference(lprobs, target, smoothing, ignore_index):
    V = lprobs.shape[-1]
    lp2 = lprobs.reshape(-1, V).astype(jnp.float32)
    tgt2 = target.reshape(-1)
    nll = -jnp.take_along_axis(lp2, tgt2[:, None], axis=-1)[:, 0]
    smooth = -jnp.sum(lp2, axis=-1)
    if ignore_index is not None:
        pad = tgt2 == ignore_index
        nll = jnp.where(pad, 0.0, nll)
        smooth = jnp.where(pad, 0.0, smooth)
    eps_i = smoothing / V
    return (1.0 - smoothing) * jnp.sum(nll) + eps_i * jnp.sum(smooth)


if __name__ == "__main__":
    key = jax.random.PRNGKey(0)
    smoothing = 0.1
    ignore_index = 1                       # padding index
    vocab = 128

    # --- Test 1: small f32 input, exact tile fit (original shapes) ---
    batch, seq = 2, 8
    k1, k2 = jax.random.split(key)
    logits = jax.random.normal(k1, (batch, seq, vocab), dtype=jnp.float32)
    lprobs = jax.nn.log_softmax(logits, axis=-1)
    target = jax.random.randint(k2, (batch, seq), 0, vocab, dtype=jnp.int32)
    target = target.at[0, 0].set(ignore_index).at[1, 3].set(ignore_index)

    loss = label_smoothed_cross_entropy(
        lprobs, target, smoothing=smoothing, ignore_index=ignore_index)
    loss = jax.block_until_ready(loss)
    ref = _reference(lprobs, target, smoothing, ignore_index)
    assert jnp.allclose(loss, ref, rtol=1e-5, atol=1e-5), (loss, ref)

    # --- Test 2: bf16 lprobs (native-dtype streaming), ragged N with a partial
    #     tail tile and the 2-way outer split (row_tile forced small) ---
    k3, k4 = jax.random.split(k2)
    logits2 = jax.random.normal(k3, (3, 8, vocab), dtype=jnp.float32)   # N = 24
    lprobs2 = jax.nn.log_softmax(logits2, axis=-1).astype(jnp.bfloat16)
    target2 = jax.random.randint(k4, (3, 8), 0, vocab, dtype=jnp.int32)
    target2 = target2.at[2, 5].set(ignore_index)

    loss2 = label_smoothed_cross_entropy(
        lprobs2, target2, smoothing=smoothing, ignore_index=ignore_index,
        row_tile=16)
    loss2 = jax.block_until_ready(loss2)
    ref2 = _reference(lprobs2, target2, smoothing, ignore_index)
    assert jnp.allclose(loss2, ref2, rtol=1e-2, atol=1e-2), (loss2, ref2)

    # --- Test 3: odd number of tiles (exercises the clamped duplicate tail tile
    #     on the 2-way split), no ignore_index ---
    k5, k6 = jax.random.split(k4)
    logits3 = jax.random.normal(k5, (5, 8, vocab), dtype=jnp.float32)   # N = 40
    lprobs3 = jax.nn.log_softmax(logits3, axis=-1)
    target3 = jax.random.randint(k6, (5, 8), 0, vocab, dtype=jnp.int32)

    loss3 = label_smoothed_cross_entropy(
        lprobs3, target3, smoothing=smoothing, ignore_index=None, row_tile=16)
    loss3 = jax.block_until_ready(loss3)
    ref3 = _reference(lprobs3, target3, smoothing, None)
    assert jnp.allclose(loss3, ref3, rtol=1e-5, atol=1e-3), (loss3, ref3)

    print("KERNEL_OK")
</pallas_src>

<mosaic_0001>
module attributes {stable_mosaic.version = 11 : i64} {
  func.func @_ls_ce_kernel(%arg0: i32, %arg1: i32, %arg2: memref<16x128xf32, #tpu.memory_space<vmem>>, %arg3: memref<16x1xi32, #tpu.memory_space<vmem>>, %arg4: memref<1x1xf32, #tpu.memory_space<vmem>>, %arg5: memref<1xf32, #tpu.memory_space<smem>>, %arg6: memref<1xf32, #tpu.memory_space<smem>>) attributes {dimension_semantics = [#tpu.dimension_semantics<parallel>, #tpu.dimension_semantics<arbitrary>], iteration_bounds = array<i64: 1, 1>, scalar_prefetch = 0 : i64, scratch_operands = 2 : i64, tpu.core_type = #tpu.core_type<tc>, window_params = [{transform_indices = @transform_0, window_bounds = array<i64: 16, 128>}, {transform_indices = @transform_1, window_bounds = array<i64: 16, 1>}, {transform_indices = @transform_2, window_bounds = array<i64: 1, 1>}]} {
    %c0_i32 = arith.constant 0 : i32
    %0 = arith.cmpi eq, %arg1, %c0_i32 : i32
    %1 = arith.extui %0 : i1 to i32
    %c0_i32_0 = arith.constant 0 : i32
    %2 = arith.cmpi ne, %1, %c0_i32_0 : i32
    scf.if %2 {
      %cst_17 = arith.constant 0.000000e+00 : f32
      %c0_18 = arith.constant 0 : index
      %44 = memref.load %arg5[%c0_18] : memref<1xf32, #tpu.memory_space<smem>>
      memref.store %cst_17, %arg5[%c0_18] : memref<1xf32, #tpu.memory_space<smem>>
      %cst_19 = arith.constant 0.000000e+00 : f32
      %c0_20 = arith.constant 0 : index
      %45 = memref.load %arg6[%c0_20] : memref<1xf32, #tpu.memory_space<smem>>
      memref.store %cst_19, %arg6[%c0_20] : memref<1xf32, #tpu.memory_space<smem>>
    } else {
    }
    %c0 = arith.constant 0 : index
    %c0_1 = arith.constant 0 : index
    %3 = vector.load %arg2[%c0, %c0_1] : memref<16x128xf32, #tpu.memory_space<vmem>>, vector<16x128xf32>
    %c0_2 = arith.constant 0 : index
    %c0_3 = arith.constant 0 : index
    %4 = vector.load %arg3[%c0_2, %c0_3] : memref<16x1xi32, #tpu.memory_space<vmem>>, vector<16x1xi32>
    %c1_i32 = arith.constant 1 : i32
    %5 = arith.muli %arg0, %c1_i32 : i32
    %6 = arith.addi %5, %arg1 : i32
    %c16_i32 = arith.constant 16 : i32
    %7 = arith.muli %6, %c16_i32 : i32
    %8 = tpu.iota {dimensions = array<i32: 0>} : vector<16x1xi32>
    %9 = vector.broadcast %7 : i32 to vector<16x1xi32>
    %10 = arith.addi %9, %8 : vector<16x1xi32>
    %c16_i32_4 = arith.constant 16 : i32
    %11 = vector.broadcast %c16_i32_4 : i32 to vector<16x1xi32>
    %12 = arith.cmpi slt, %10, %11 : vector<16x1xi32>
    %c1_i32_5 = arith.constant 1 : i32
    %13 = vector.broadcast %c1_i32_5 : i32 to vector<16x1xi32>
    %14 = arith.cmpi ne, %4, %13 : vector<16x1xi32>
    %15 = arith.andi %12, %14 : vector<16x1xi1>
    %cst = arith.constant 0.000000e+00 : f32
    %16 = vector.shape_cast %15 : vector<16x1xi1> to vector<16x1xi1>
    %17 = vector.broadcast %16 : vector<16x1xi1> to vector<16x128xi1>
    %18 = vector.broadcast %cst : f32 to vector<16x128xf32>
    %19 = arith.select %17, %3, %18 : vector<16x128xi1>, vector<16x128xf32>
    %20 = tpu.iota {dimensions = array<i32: 1>} : vector<16x128xi32>
    %21 = vector.broadcast %4 : vector<16x1xi32> to vector<16x128xi32>
    %22 = arith.cmpi eq, %20, %21 : vector<16x128xi32>
    %cst_6 = arith.constant 0.000000e+00 : f32
    %23 = vector.broadcast %cst_6 : f32 to vector<16x128xf32>
    %24 = arith.select %22, %19, %23 : vector<16x128xi1>, vector<16x128xf32>
    %25 = vector.shape_cast %24 : vector<16x128xf32> to vector<1x16x128xf32>
    %cst_7 = arith.constant dense<0.000000e+00> : vector<1xf32>
    %26 = vector.multi_reduction <add>, %25, %cst_7 [1, 2] : vector<1x16x128xf32> to vector<1xf32>
    %27 = vector.shape_cast %26 : vector<1xf32> to vector<1x1x1xf32>
    %28 = vector.extract %27[0, 0, 0] : f32 from vector<1x1x1xf32>
    %29 = vector.shape_cast %19 : vector<16x128xf32> to vector<1x16x128xf32>
    %cst_8 = arith.constant dense<0.000000e+00> : vector<1xf32>
    %30 = vector.multi_reduction <add>, %29, %cst_8 [1, 2] : vector<1x16x128xf32> to vector<1xf32>
    %31 = vector.shape_cast %30 : vector<1xf32> to vector<1x1x1xf32>
    %32 = vector.extract %31[0, 0, 0] : f32 from vector<1x1x1xf32>
    %c0_9 = arith.constant 0 : index
    %33 = memref.load %arg5[%c0_9] : memref<1xf32, #tpu.memory_space<smem>>
    %cst_10 = arith.constant 0.000000e+00 : f32
    %34 = arith.subf %cst_10, %28 : f32
    %35 = arith.addf %33, %34 : f32
    %c0_11 = arith.constant 0 : index
    %36 = memref.load %arg5[%c0_11] : memref<1xf32, #tpu.memory_space<smem>>
    memref.store %35, %arg5[%c0_11] : memref<1xf32, #tpu.memory_space<smem>>
    %c0_12 = arith.constant 0 : index
    %37 = memref.load %arg6[%c0_12] : memref<1xf32, #tpu.memory_space<smem>>
    %cst_13 = arith.constant 0.000000e+00 : f32
    %38 = arith.subf %cst_13, %32 : f32
    %39 = arith.addf %37, %38 : f32
    %c0_14 = arith.constant 0 : index
    %40 = memref.load %arg6[%c0_14] : memref<1xf32, #tpu.memory_space<smem>>
    memref.store %39, %arg6[%c0_14] : memref<1xf32, #tpu.memory_space<smem>>
    %c0_i32_15 = arith.constant 0 : i32
    %41 = arith.cmpi eq, %arg1, %c0_i32_15 : i32
    %42 = arith.extui %41 : i1 to i32
    %c0_i32_16 = arith.constant 0 : i32
    %43 = arith.cmpi ne, %42, %c0_i32_16 : i32
    scf.if %43 {
      %c0_17 = arith.constant 0 : index
      %44 = memref.load %arg5[%c0_17] : memref<1xf32, #tpu.memory_space<smem>>
      %cst_18 = arith.constant 0.899999976 : f32
      %45 = arith.mulf %cst_18, %44 : f32
      %c0_19 = arith.constant 0 : index
      %46 = memref.load %arg6[%c0_19] : memref<1xf32, #tpu.memory_space<smem>>
      %cst_20 = arith.constant 7.812500e-04 : f32
      %47 = arith.mulf %cst_20, %46 : f32
      %48 = arith.addf %45, %47 : f32
      %49 = vector.broadcast %48 : f32 to vector<1x1xf32>
      %c0_21 = arith.constant 0 : index
      %c0_22 = arith.constant 0 : index
      %50 = vector.load %arg4[%c0_21, %c0_22] : memref<1x1xf32, #tpu.memory_space<vmem>>, vector<1x1xf32>
      tpu.vector_store %arg4[%c0_21, %c0_22], %49 {strides = array<i32>} : memref<1x1xf32, #tpu.memory_space<vmem>>, vector<1x1xf32>,
    } else {
    }
    return
  }
  func.func @transform_0(%arg0: i32, %arg1: i32) -> (i32, i32) {
    %c1_i32 = arith.constant 1 : i32
    %0 = arith.muli %arg0, %c1_i32 : i32
    %1 = arith.addi %0, %arg1 : i32
    %c0_i32 = arith.constant 0 : i32
    %2 = arith.minsi %1, %c0_i32 : i32
    %c0_i32_0 = arith.constant 0 : i32
    %c0_i32_1 = arith.constant 0 : i32
    return %2, %c0_i32_0 : i32, i32
  }
  func.func @transform_1(%arg0: i32, %arg1: i32) -> (i32, i32) {
    %c1_i32 = arith.constant 1 : i32
    %0 = arith.muli %arg0, %c1_i32 : i32
    %1 = arith.addi %0, %arg1 : i32
    %c0_i32 = arith.constant 0 : i32
    %2 = arith.minsi %1, %c0_i32 : i32
    %c0_i32_0 = arith.constant 0 : i32
    %c0_i32_1 = arith.constant 0 : i32
    return %2, %c0_i32_0 : i32, i32
  }
  func.func @transform_2(%arg0: i32, %arg1: i32) -> (i32, i32) {
    %c0_i32 = arith.constant 0 : i32
    %c0_i32_0 = arith.constant 0 : i32
    return %arg0, %c0_i32 : i32, i32
  }
}

</mosaic_0001>

<llo_original>
// kernel: tpu_custom_call.1
$region0: #{tpu_custom_call.1}
  #allocation0 [shape = 'u32[]', space=smem, size = 0x4, offset = 0x4, fixed_abs, tag = 'smem constant byte address 0x4 - core index']
  #allocation1 [shape = 'u32[144,128]{1,0:T(1,128)}', space=vmem, size = 0x12000, scoped, tag = 'internal scratch']
  #allocation2 [shape = 'f32[1]{0:T(128)}', space=smem, size = 0x200, scoped, tag = 'scratch operand']
  #allocation3 [shape = 'f32[1]{0:T(128)}', space=smem, size = 0x200, scoped, tag = 'scratch operand']
  %s0 = inlined_call_operand.vmem [shape: f32[16,128], index: 0, kind: input, shape index: {}]
  %s1 = inlined_call_operand.vmem [shape: s32[16,1], index: 1, kind: input, shape index: {}]
  %s2 = inlined_call_operand.hbm [shape: f32[1,1], index: 2, kind: output, shape index: {}]
  %s3 = sld [smem:[#allocation0]]
  $region26: #{tpu_custom_call.1} parent=0
    _
  %s5 = ssub.s32 1, %s3
  %s6 = scalar_select 0, %s5, %s3
  $region1: #{tpu_custom_call.1} parent=0
    #allocation4 [shape = 'u8[512]{0}', space=vmem, size = 0x400, scoped, tag = 'output window, operand 0, single buffered']
    #allocation5 [shape = 's32[1]{0}', space=sflag, size = 0x4, scoped, tag = 'scoped memory for tpu_custom_call.1']
    %7 = vsyncpa [#allocation5], 0
    // Predicated region
    $region2: #{tpu_custom_call.1} parent=1 // pred_check
      _
    $region3: #{tpu_custom_call.1} parent=1 // pred_check_branch
      %9 = sbr.rel (0) target = $region5
    $region4: #{tpu_custom_call.1} parent=1 // pred_region
      %s10 = sadd.s32 0, 0
      %p11 = scmp.lt.s32.totalorder %s10, 0
      %s12 = scalar_select %p11, %s10, 0
      %s13 = smul.u32 2, %s12
      %p14 = scmp.lt.s32.totalorder %s13, 1
      %s15 = scalar_select %p14, %s13, 1
      %s16 = smul.addr %s15, 8
      %s17 = scalar_lea.vmem %s0, %s16
      %s18 = sadd.s32 0, 0
      %p19 = scmp.lt.s32.totalorder %s18, 0
      %s20 = scalar_select %p19, %s18, 0
      %s21 = smul.u32 2, %s20
    $region5: #{tpu_custom_call.1} parent=1 // pred_fallthru
      _
    // Predicated region
    $region6: #{tpu_custom_call.1} parent=1 // pred_check
      _
    $region7: #{tpu_custom_call.1} parent=1 // pred_check_branch
      %23 = sbr.rel (0) target = $region9
    $region8: #{tpu_custom_call.1} parent=1 // pred_region
      %s24 = sadd.s32 0, 0
      %p25 = scmp.lt.s32.totalorder %s24, 0
      %s26 = scalar_select %p25, %s24, 0
      %s27 = smul.u32 2, %s26
      %p28 = scmp.lt.s32.totalorder %s27, 1
      %s29 = scalar_select %p28, %s27, 1
      %s30 = smul.addr %s29, 8
      %s31 = scalar_lea.vmem %s1, %s30
      %s32 = sadd.s32 0, 0
      %p33 = scmp.lt.s32.totalorder %s32, 0
      %s34 = scalar_select %p33, %s32, 0
      %s35 = smul.u32 2, %s34
    $region9: #{tpu_custom_call.1} parent=1 // pred_fallthru
      _
    %s36 = sadd.s32 0, 0
    %p37 = scmp.lt.s32.totalorder %s36, 0
    %s38 = scalar_select %p37, %s36, 0
    %s39 = smul.u32 2, %s38
    %p40 = scmp.lt.s32.totalorder %s39, 1
    %s41 = scalar_select %p40, %s39, 1
    %s42 = smul.addr %s41, 8
    %s43 = scalar_lea.vmem %s0, %s42
    %s44 = sadd.s32 0, 0
    %p45 = scmp.lt.s32.totalorder %s44, 0
    %s46 = scalar_select %p45, %s44, 0
    %s47 = smul.u32 2, %s46
    %p48 = scmp.lt.s32.totalorder %s47, 1
    %s49 = scalar_select %p48, %s47, 1
    %s50 = smul.addr %s49, 8
    %s51 = scalar_lea.vmem %s1, %s50
    %s52 = sadd.s32 0, 0
    %p53 = scmp.lt.s32.totalorder %s52, 0
    %s54 = scalar_select %p53, %s52, 0
    %s55 = smul.u32 2, %s54
    %p56 = scmp.lt.s32.totalorder %s55, 1
    %s57 = scalar_select %p56, %s55, 1
    %s58 = smul.addr %s57, 8
    %s59 = scalar_lea.vmem %s0, %s58
    %s60 = sadd.s32 0, 0
    %p61 = scmp.lt.s32.totalorder %s60, 0
    %s62 = scalar_select %p61, %s60, 0
    %s63 = smul.u32 2, %s62
    %s64 = sadd.s32 0, 0
    %p65 = scmp.lt.s32.totalorder %s64, 0
    %s66 = scalar_select %p65, %s64, 0
    %s67 = smul.u32 2, %s66
    %p68 = scmp.lt.s32.totalorder %s67, 1
    %s69 = scalar_select %p68, %s67, 1
    %s70 = smul.addr %s69, 8
    %s71 = scalar_lea.vmem %s1, %s70
    %s72 = sadd.s32 0, 0
    %p73 = scmp.lt.s32.totalorder %s72, 0
    %s74 = scalar_select %p73, %s72, 0
    %s75 = smul.u32 2, %s74
    %p76 = scmp.eq.s32.totalorder 0, 0
    // Predicated region
    $region10: #{tpu_custom_call.1} parent=1 // pred_check
      %p77 = pneg %p76
    $region11: #{tpu_custom_call.1} parent=1 // pred_check_branch
      %79 = sbr.rel (%p77) target = $region13
    $region12: #{tpu_custom_call.1} parent=1 // pred_region
      %s80 = scalar_lea.smem [#allocation2], 0
      %81 = sst [smem:[%s80]] 0.0
      %s82 = scalar_lea.smem [#allocation3], 0
      %83 = sst [smem:[%s82]] 0.0
    $region13: #{tpu_custom_call.1} parent=1 // pred_fallthru
      _
    %v84 = vld [vmem:[%s59] sm:$0xff]
    %v85 = vld [vmem:[%s59 + $0x8] sm:$0xff]
    %v86 = vld [vmem:[%s71] sm:$0xff]
    %v87 = vld [vmem:[%s71 + $0x8] sm:$0xff]
    %s88 = sadd.s32 0, 0
    %s89 = smul.u32 %s88, 16
    %v90 = vlaneseq
    %v91 = vshrl.u32 %v90, 7
    %v92 = vadd.s32 %v91, 8
    %v93 = vstv %s89
    %v94 = vadd.s32 %v93, %v91
    %v95 = vadd.s32 %v93, %v92
    %vm96 = vcmp.lt.s32.totalorder %v94, 16
    %vm97 = vcmp.lt.s32.totalorder %v95, 16
    %vm98 = vcmp.ne.s32.totalorder %v86, 1
    %vm99 = vcmp.ne.s32.totalorder %v87, 1
    %vm100 = vmand %vm96, %vm98
    %vm101 = vmand %vm97, %vm99
    %v102 = vsel %vm100, 1, 0
    %v103 = vsel %vm101, 1, 0
    %104 = vset.pattern.permute.xlu0 0
    %105 = vperm.xlu0 %104, %v102
    %v106 = vpop.permute.xlu0 %105
    %107 = vset.pattern.permute.xlu0 0
    %108 = vperm.xlu0 %107, %v103
    %v109 = vpop.permute.xlu0 %108
    %vm110 = vcmp.eq.s32.totalorder %v106, 1
    %vm111 = vcmp.eq.s32.totalorder %v109, 1
    %v112 = vsel %vm110, %v84, 0.0
    %v113 = vsel %vm111, %v85, 0.0
    %v114 = vlaneseq
    %v115 = vand.u32 %v114, 127
    %116 = vset.pattern.permute.xlu0 0
    %117 = vperm.xlu0 %116, %v86
    %v118 = vpop.permute.xlu0 %117
    %119 = vset.pattern.permute.xlu0 0
    %120 = vperm.xlu0 %119, %v87
    %v121 = vpop.permute.xlu0 %120
    %vm122 = vcmp.eq.s32.totalorder %v115, %v118
    %vm123 = vcmp.eq.s32.totalorder %v115, %v121
    %v124 = vsel %vm122, %v112, 0.0
    %v125 = vsel %vm123, %v113, 0.0
    %v126 = vadd.f32 %v124, %v125
    %127 = vadd.xlane.f32.xlu0 %v126
    %v128 = vpop.xlane.xlu0 %127
    %v129 = vrot.slane %v128, 4
    %v130 = vadd.f32 %v128, %v129
    %v131 = vrot.slane %v130, 2
    %v132 = vadd.f32 %v130, %v131
    %v133 = vrot.slane %v132, 1
    %v134 = vadd.f32 %v132, %v133
    %s135 = vtos %v134
    %v136 = vadd.f32 %v112, %v113
    %137 = vadd.xlane.f32.xlu0 %v136
    %v138 = vpop.xlane.xlu0 %137
    %v139 = vrot.slane %v138, 4
    %v140 = vadd.f32 %v138, %v139
    %v141 = vrot.slane %v140, 2
    %v142 = vadd.f32 %v140, %v141
    %v143 = vrot.slane %v142, 1
    %v144 = vadd.f32 %v142, %v143
    %s145 = vtos %v144
    %s146 = sld [smem:[#allocation2]]
    %s147 = ssub.f32 0.0, %s135
    %s148 = sadd.f32 %s146, %s147
    %s149 = scalar_lea.smem [#allocation2], 0
    %150 = sst [smem:[%s149]] %s148
    %s151 = sld [smem:[#allocation3]]
    %s152 = ssub.f32 0.0, %s145
    %s153 = sadd.f32 %s151, %s152
    %s154 = scalar_lea.smem [#allocation3], 0
    %155 = sst [smem:[%s154]] %s153
    // Predicated region
    $region14: #{tpu_custom_call.1} parent=1 // pred_check
      %p156 = pneg %p76
    $region15: #{tpu_custom_call.1} parent=1 // pred_check_branch
      %158 = sbr.rel (%p156) target = $region17
    $region16: #{tpu_custom_call.1} parent=1 // pred_region
      %s159 = sld [smem:[#allocation2]]
      %s160 = smul.f32 %s159, 0.9
      %s161 = sld [smem:[#allocation3]]
      %s162 = smul.f32 %s161, 0.00078125
      %s163 = sadd.f32 %s160, %s162
      %v164 = vstv %s163
      %vm165 = vcmask 0
      %166 = vst.msk [vmem:[#allocation4] sm:$0x1] %vm165, %v164
    $region17: #{tpu_custom_call.1} parent=1 // pred_fallthru
      _
    // Predicated region
    $region18: #{tpu_custom_call.1} parent=1 // pred_check
      _
    $region19: #{tpu_custom_call.1} parent=1 // pred_check_branch
      %168 = sbr.rel (0) target = $region21
    $region20: #{tpu_custom_call.1} parent=1 // pred_region
      %s170 = ssub.s32 16, 16
      %171 = vsyncadd [#allocation5], %s170
      %s173 = sshll.u32 [#allocation4], 4
      %s174 = int_to_ptr.vmem [resolvable:$true] %s173
      %176 = dma.vmem_to_hbm [thread:$0]  %s174, 16, %s2, [#allocation5]
    $region21: #{tpu_custom_call.1} parent=1 // pred_fallthru
      _
    // Predicated region
    $region22: #{tpu_custom_call.1} parent=1 // pred_check
      _
    $region23: #{tpu_custom_call.1} parent=1 // pred_check_branch
      %178 = sbr.rel (0) target = $region25
    $region24: #{tpu_custom_call.1} parent=1 // pred_region
      %179 = dma.done [#allocation5], 16
    $region25: #{tpu_custom_call.1} parent=1 // pred_fallthru
      _
    %180 = vsyncpa [#allocation5], 1

</llo_original>
